<compile_context>
chip_gen: v5e
topology: v5e:2x2
jax: 0.10.0
libtpu: 0.0.40
codegen_flags: <defaults>
</compile_context>

<pallas_src>
import functools

import jax
import jax.numpy as jnp
from jax.experimental import pallas as pl
from jax.experimental.pallas import tpu as pltpu

BN_EPS = 1e-5


# ------------------------------ Pallas kernel ------------------------------ #
def _resblock_kernel(x_ref, w_ref, off_ref, o_ref, slab_ref, *, K):
    """Fused ResidualBlock forward for Bt batch elements.

    x_ref:    (Bt, C, L)     input (also the residual)
    w_ref:    (2, C, K*C)    [conv1, conv2] weights, tap-major, BN-scale folded
    off_ref:  (2, C, 1)      [offset1, offset2]  (conv bias + BN folded)
    o_ref:    (Bt, C, L)     output
    slab_ref: (K*C, Bt*L)    VMEM scratch, reused by both convs
    """
    Bt, C, L = x_ref.shape
    pad = K // 2

    # Hoisted edge-replication masks (shared by both convs and all batches).
    lane = jax.lax.broadcasted_iota(jnp.int32, (C, L), 1)
    masks = {}
    for k in range(K):
        s = k - pad
        if s > 0:
            masks[s] = lane >= (L - s)          # wrapped tail -> last column
        elif s < 0:
            masks[s] = lane < (-s)              # wrapped head -> first column

    def fill_slab(get_h):
        """Write the K taps of each batch element into the (K*C, Bt*L) slab."""
        for b in range(Bt):                      # static unroll (Bt small)
            h = get_h(b)                         # (C, L)
            first = h[:, 0:1]                    # (C, 1) left-edge column
            last = h[:, L - 1:L]                 # (C, 1) right-edge column
            for k in range(K):                   # static unroll
                s = k - pad
                if s == 0:
                    tap = h
                else:
                    # Lane-aligned XLU rotate: r[:, l] = h[:, (l + s) mod L]
                    r = pltpu.roll(h, shift=(-s) % L, axis=1)
                    tap = jnp.where(masks[s], last if s > 0 else first, r)
                slab_ref[pl.ds(k * C, C), pl.ds(b * L, L)] = tap

    # conv1 -> bn1 -> relu   (BN scale pre-folded into w_ref[0])
    fill_slab(lambda b: x_ref[b])
    h1 = jnp.dot(w_ref[0], slab_ref[...], preferred_element_type=jnp.float32)
    h1 = jnp.maximum(h1 + off_ref[0], 0.0)       # (C, Bt*L)

    # conv2 -> bn2 -> (+ residual) -> relu
    fill_slab(lambda b: h1[:, b * L:(b + 1) * L])
    h2 = jnp.dot(w_ref[1], slab_ref[...], preferred_element_type=jnp.float32)
    h2 = h2 + off_ref[1]                         # (C, Bt*L)
    for b in range(Bt):
        o_ref[b] = jnp.maximum(h2[:, b * L:(b + 1) * L] + x_ref[b], 0.0)


# ------------------------------ host wrapper ------------------------------- #
def residual_block_forward(x, w_flat, offsets, *, block_batch=None):
    """x: (B, C, L) f32; w_flat: (2, C, K*C); offsets: (2, C, 1)."""
    B, C, L = x.shape
    K = w_flat.shape[2] // C

    if block_batch is None:
        # Fold as many batch elements as possible into the matmul N/lane axis
        # (>=256 lanes fills the v6e/v7x MXU), capped so the slab stays a few
        # MiB of VMEM on every generation; must divide B.
        max_bt = max(1, 2048 // L)
        block_batch = B
        while block_batch > max_bt or B % block_batch != 0:
            block_batch -= 1
    Bt = block_batch
    grid = (B // Bt,)

    kernel = functools.partial(_resblock_kernel, K=K)
    flops = 2 * 2 * C * (K * C) * B * L                       # two convs
    bytes_accessed = 2 * B * C * L * 4 + 2 * C * K * C * 4 + 2 * C * 4

    return pl.pallas_call(
        kernel,
        out_shape=jax.ShapeDtypeStruct((B, C, L), jnp.float32),
        grid=grid,
        in_specs=[
            pl.BlockSpec((Bt, C, L), lambda i: (i, 0, 0)),
            pl.BlockSpec((2, C, K * C), lambda i: (0, 0, 0)),
            pl.BlockSpec((2, C, 1), lambda i: (0, 0, 0)),
        ],
        out_specs=pl.BlockSpec((Bt, C, L), lambda i: (i, 0, 0)),
        scratch_shapes=[pltpu.VMEM((K * C, Bt * L), jnp.float32)],
        compiler_params=pltpu.CompilerParams(dimension_semantics=("parallel",)),
        cost_estimate=pl.CostEstimate(
            flops=flops, transcendentals=0, bytes_accessed=bytes_accessed),
    )(x, w_flat, offsets)


def fold_params(p):
    """Fold eval-mode BN (scale into weights) + conv bias; flatten weights.

    Returns w_flat (2, C, K*C) with w_flat[i, o, k*C + c] = w_i[o, c, k]*scale_i[o],
    and offsets (2, C, 1) with offsets[i] = (bias_i - mean_i)*scale_i + beta_i.
    """
    # TODO(synk): BatchNorm1d is folded in eval mode (running stats);
    # training-mode batch statistics / running-stat updates are not modeled.
    def fold(w, b, gamma, beta, mean, var):
        scale = gamma / jnp.sqrt(var + BN_EPS)
        return w * scale[:, None, None], (b - mean) * scale + beta

    C, _, K = p["w1"].shape
    w1s, o1 = fold(p["w1"], p["b1"], p["g1"], p["be1"], p["m1"], p["v1"])
    w2s, o2 = fold(p["w2"], p["b2"], p["g2"], p["be2"], p["m2"], p["v2"])
    w1f = jnp.transpose(w1s, (0, 2, 1)).reshape(C, K * C)
    w2f = jnp.transpose(w2s, (0, 2, 1)).reshape(C, K * C)
    w_flat = jnp.stack([w1f, w2f], axis=0)
    offsets = jnp.stack([o1, o2], axis=0)[:, :, None]
    return w_flat, offsets


def init_params(key, channels, kernel_size):
    """Deterministic synthetic parameters (PyTorch-equivalent shapes)."""
    def conv_init(k, cout, cin, ksize):
        fan_in = cin * ksize
        bound = 1.0 / jnp.sqrt(fan_in)
        kw, kb = jax.random.split(k)
        w = jax.random.uniform(kw, (cout, cin, ksize), jnp.float32, -bound, bound)
        b = jax.random.uniform(kb, (cout,), jnp.float32, -bound, bound)
        return w, b

    def bn_init(k, c):
        k1, k2, k3, k4 = jax.random.split(k, 4)
        gamma = 1.0 + 0.1 * jax.random.normal(k1, (c,), jnp.float32)
        beta = 0.1 * jax.random.normal(k2, (c,), jnp.float32)
        mean = 0.05 * jax.random.normal(k3, (c,), jnp.float32)
        var = 1.0 + 0.1 * jax.random.uniform(k4, (c,), jnp.float32)
        return gamma, beta, mean, var

    k1, k2, k3, k4 = jax.random.split(key, 4)
    w1, b1 = conv_init(k1, channels, channels, kernel_size)
    g1, be1, m1, v1 = bn_init(k2, channels)
    w2, b2 = conv_init(k3, channels, channels, kernel_size)
    g2, be2, m2, v2 = bn_init(k4, channels)
    return dict(w1=w1, b1=b1, g1=g1, be1=be1, m1=m1, v1=v1,
                w2=w2, b2=b2, g2=g2, be2=be2, m2=m2, v2=v2)


# --------------------------- pure-JAX reference ----------------------------- #
def _ref_conv1d_replicate(x, w, b):
    K = w.shape[2]
    pad = K // 2
    L = x.shape[2]
    xp = jnp.pad(x, ((0, 0), (0, 0), (pad, pad)), mode="edge")
    out = b[None, :, None]
    for k in range(K):
        out = out + jnp.einsum("oc,bcl->bol", w[:, :, k], xp[:, :, k:k + L])
    return out


def _ref_bn(x, gamma, beta, mean, var):
    inv = gamma / jnp.sqrt(var + BN_EPS)
    return (x - mean[None, :, None]) * inv[None, :, None] + beta[None, :, None]


def _ref_residual_block(x, p):
    h = _ref_conv1d_replicate(x, p["w1"], p["b1"])
    h = _ref_bn(h, p["g1"], p["be1"], p["m1"], p["v1"])
    h = jnp.maximum(h, 0.0)
    h = _ref_conv1d_replicate(h, p["w2"], p["b2"])
    h = _ref_bn(h, p["g2"], p["be2"], p["m2"], p["v2"])
    return jnp.maximum(h + x, 0.0)


# ----------------------------------- main ----------------------------------- #
if __name__ == "__main__":
    CHANNELS = 32
    KERNEL_SIZE = 5
    BATCH, SEQ_LEN = 2, 128

    key = jax.random.PRNGKey(0)
    kx, kp = jax.random.split(key)
    x = jax.random.normal(kx, (BATCH, CHANNELS, SEQ_LEN), jnp.float32)
    raw = init_params(kp, CHANNELS, KERNEL_SIZE)
    w_flat, offsets = fold_params(raw)

    out = jax.jit(residual_block_forward)(x, w_flat, offsets)
    out = jax.block_until_ready(out)

    ref = _ref_residual_block(x, raw)
    assert out.shape == x.shape and out.dtype == jnp.float32
    assert jnp.allclose(out, ref, atol=1e-3, rtol=1e-3), "mismatch vs reference"

    print("KERNEL_OK")
</pallas_src>

<mosaic_0001>
module attributes {stable_mosaic.version = 11 : i64} {
  func.func @_resblock_kernel(%arg0: i32, %arg1: memref<2x32x128xf32, #tpu.memory_space<vmem>>, %arg2: memref<2x32x160xf32, #tpu.memory_space<vmem>>, %arg3: memref<2x32x1xf32, #tpu.memory_space<vmem>>, %arg4: memref<2x32x128xf32, #tpu.memory_space<vmem>>, %arg5: memref<160x256xf32, #tpu.memory_space<vmem>>) attributes {dimension_semantics = [#tpu.dimension_semantics<parallel>], iteration_bounds = array<i64: 1>, scalar_prefetch = 0 : i64, scratch_operands = 1 : i64, tpu.core_type = #tpu.core_type<tc>, window_params = [{transform_indices = @transform_0, window_bounds = array<i64: 2, 32, 128>}, {pipeline_mode = #tpu.pipeline_mode<synchronous>, transform_indices = @transform_1, window_bounds = array<i64: 2, 32, 160>}, {pipeline_mode = #tpu.pipeline_mode<synchronous>, transform_indices = @transform_2, window_bounds = array<i64: 2, 32, 1>}, {transform_indices = @transform_3, window_bounds = array<i64: 2, 32, 128>}]} {
    %0 = tpu.iota {dimensions = array<i32: 1>} : vector<32x128xi32>
    %c2_i32 = arith.constant 2 : i32
    %1 = vector.broadcast %c2_i32 : i32 to vector<32x128xi32>
    %2 = arith.cmpi slt, %0, %1 : vector<32x128xi32>
    %c1_i32 = arith.constant 1 : i32
    %3 = vector.broadcast %c1_i32 : i32 to vector<32x128xi32>
    %4 = arith.cmpi slt, %0, %3 : vector<32x128xi32>
    %c127_i32 = arith.constant 127 : i32
    %5 = vector.broadcast %c127_i32 : i32 to vector<32x128xi32>
    %6 = arith.cmpi sge, %0, %5 : vector<32x128xi32>
    %c126_i32 = arith.constant 126 : i32
    %7 = vector.broadcast %c126_i32 : i32 to vector<32x128xi32>
    %8 = arith.cmpi sge, %0, %7 : vector<32x128xi32>
    %c0 = arith.constant 0 : index
    %c0_0 = arith.constant 0 : index
    %c0_1 = arith.constant 0 : index
    %9 = vector.load %arg1[%c0, %c0_0, %c0_1] : memref<2x32x128xf32, #tpu.memory_space<vmem>>, vector<1x32x128xf32>
    %10 = vector.shape_cast %9 : vector<1x32x128xf32> to vector<32x128xf32>
    %11 = vector.extract_strided_slice %10 {offsets = [0, 0], sizes = [32, 1], strides = [1, 1]} : vector<32x128xf32> to vector<32x1xf32>
    %12 = vector.extract_strided_slice %10 {offsets = [0, 127], sizes = [32, 1], strides = [1, 1]} : vector<32x128xf32> to vector<32x1xf32>
    %c2_i32_2 = arith.constant 2 : i32
    %13 = tpu.dynamic_rotate %10 by %c2_i32_2 dim 1 : vector<32x128xf32>, i32 -> vector<32x128xf32>
    %14 = vector.shape_cast %11 : vector<32x1xf32> to vector<32x1xf32>
    %15 = vector.broadcast %14 : vector<32x1xf32> to vector<32x128xf32>
    %16 = arith.select %2, %15, %13 : vector<32x128xi1>, vector<32x128xf32>
    %c0_3 = arith.constant 0 : index
    %c0_4 = arith.constant 0 : index
    %17 = vector.load %arg5[%c0_3, %c0_4] : memref<160x256xf32, #tpu.memory_space<vmem>>, vector<32x128xf32>
    tpu.vector_store %arg5[%c0_3, %c0_4], %16 {strides = array<i32>} : memref<160x256xf32, #tpu.memory_space<vmem>>, vector<32x128xf32>,
    %c1_i32_5 = arith.constant 1 : i32
    %18 = tpu.dynamic_rotate %10 by %c1_i32_5 dim 1 : vector<32x128xf32>, i32 -> vector<32x128xf32>
    %19 = vector.shape_cast %11 : vector<32x1xf32> to vector<32x1xf32>
    %20 = vector.broadcast %19 : vector<32x1xf32> to vector<32x128xf32>
    %21 = arith.select %4, %20, %18 : vector<32x128xi1>, vector<32x128xf32>
    %c32 = arith.constant 32 : index
    %c0_6 = arith.constant 0 : index
    %22 = vector.load %arg5[%c32, %c0_6] : memref<160x256xf32, #tpu.memory_space<vmem>>, vector<32x128xf32>
    tpu.vector_store %arg5[%c32, %c0_6], %21 {strides = array<i32>} : memref<160x256xf32, #tpu.memory_space<vmem>>, vector<32x128xf32>,
    %c64 = arith.constant 64 : index
    %c0_7 = arith.constant 0 : index
    %23 = vector.load %arg5[%c64, %c0_7] : memref<160x256xf32, #tpu.memory_space<vmem>>, vector<32x128xf32>
    tpu.vector_store %arg5[%c64, %c0_7], %10 {strides = array<i32>} : memref<160x256xf32, #tpu.memory_space<vmem>>, vector<32x128xf32>,
    %c127_i32_8 = arith.constant 127 : i32
    %24 = tpu.dynamic_rotate %10 by %c127_i32_8 dim 1 : vector<32x128xf32>, i32 -> vector<32x128xf32>
    %25 = vector.shape_cast %12 : vector<32x1xf32> to vector<32x1xf32>
    %26 = vector.broadcast %25 : vector<32x1xf32> to vector<32x128xf32>
    %27 = arith.select %6, %26, %24 : vector<32x128xi1>, vector<32x128xf32>
    %c96 = arith.constant 96 : index
    %c0_9 = arith.constant 0 : index
    %28 = vector.load %arg5[%c96, %c0_9] : memref<160x256xf32, #tpu.memory_space<vmem>>, vector<32x128xf32>
    tpu.vector_store %arg5[%c96, %c0_9], %27 {strides = array<i32>} : memref<160x256xf32, #tpu.memory_space<vmem>>, vector<32x128xf32>,
    %c126_i32_10 = arith.constant 126 : i32
    %29 = tpu.dynamic_rotate %10 by %c126_i32_10 dim 1 : vector<32x128xf32>, i32 -> vector<32x128xf32>
    %30 = vector.shape_cast %12 : vector<32x1xf32> to vector<32x1xf32>
    %31 = vector.broadcast %30 : vector<32x1xf32> to vector<32x128xf32>
    %32 = arith.select %8, %31, %29 : vector<32x128xi1>, vector<32x128xf32>
    %c128 = arith.constant 128 : index
    %c0_11 = arith.constant 0 : index
    %33 = vector.load %arg5[%c128, %c0_11] : memref<160x256xf32, #tpu.memory_space<vmem>>, vector<32x128xf32>
    tpu.vector_store %arg5[%c128, %c0_11], %32 {strides = array<i32>} : memref<160x256xf32, #tpu.memory_space<vmem>>, vector<32x128xf32>,
    %c1 = arith.constant 1 : index
    %c0_12 = arith.constant 0 : index
    %c0_13 = arith.constant 0 : index
    %34 = vector.load %arg1[%c1, %c0_12, %c0_13] : memref<2x32x128xf32, #tpu.memory_space<vmem>>, vector<1x32x128xf32>
    %35 = vector.shape_cast %34 : vector<1x32x128xf32> to vector<32x128xf32>
    %36 = vector.extract_strided_slice %35 {offsets = [0, 0], sizes = [32, 1], strides = [1, 1]} : vector<32x128xf32> to vector<32x1xf32>
    %37 = vector.extract_strided_slice %35 {offsets = [0, 127], sizes = [32, 1], strides = [1, 1]} : vector<32x128xf32> to vector<32x1xf32>
    %c2_i32_14 = arith.constant 2 : i32
    %38 = tpu.dynamic_rotate %35 by %c2_i32_14 dim 1 : vector<32x128xf32>, i32 -> vector<32x128xf32>
    %39 = vector.shape_cast %36 : vector<32x1xf32> to vector<32x1xf32>
    %40 = vector.broadcast %39 : vector<32x1xf32> to vector<32x128xf32>
    %41 = arith.select %2, %40, %38 : vector<32x128xi1>, vector<32x128xf32>
    %c0_15 = arith.constant 0 : index
    %c128_16 = arith.constant 128 : index
    %42 = vector.load %arg5[%c0_15, %c128_16] : memref<160x256xf32, #tpu.memory_space<vmem>>, vector<32x128xf32>
    tpu.vector_store %arg5[%c0_15, %c128_16], %41 {strides = array<i32>} : memref<160x256xf32, #tpu.memory_space<vmem>>, vector<32x128xf32>,
    %c1_i32_17 = arith.constant 1 : i32
    %43 = tpu.dynamic_rotate %35 by %c1_i32_17 dim 1 : vector<32x128xf32>, i32 -> vector<32x128xf32>
    %44 = vector.shape_cast %36 : vector<32x1xf32> to vector<32x1xf32>
    %45 = vector.broadcast %44 : vector<32x1xf32> to vector<32x128xf32>
    %46 = arith.select %4, %45, %43 : vector<32x128xi1>, vector<32x128xf32>
    %c32_18 = arith.constant 32 : index
    %c128_19 = arith.constant 128 : index
    %47 = vector.load %arg5[%c32_18, %c128_19] : memref<160x256xf32, #tpu.memory_space<vmem>>, vector<32x128xf32>
    tpu.vector_store %arg5[%c32_18, %c128_19], %46 {strides = array<i32>} : memref<160x256xf32, #tpu.memory_space<vmem>>, vector<32x128xf32>,
    %c64_20 = arith.constant 64 : index
    %c128_21 = arith.constant 128 : index
    %48 = vector.load %arg5[%c64_20, %c128_21] : memref<160x256xf32, #tpu.memory_space<vmem>>, vector<32x128xf32>
    tpu.vector_store %arg5[%c64_20, %c128_21], %35 {strides = array<i32>} : memref<160x256xf32, #tpu.memory_space<vmem>>, vector<32x128xf32>,
    %c127_i32_22 = arith.constant 127 : i32
    %49 = tpu.dynamic_rotate %35 by %c127_i32_22 dim 1 : vector<32x128xf32>, i32 -> vector<32x128xf32>
    %50 = vector.shape_cast %37 : vector<32x1xf32> to vector<32x1xf32>
    %51 = vector.broadcast %50 : vector<32x1xf32> to vector<32x128xf32>
    %52 = arith.select %6, %51, %49 : vector<32x128xi1>, vector<32x128xf32>
    %c96_23 = arith.constant 96 : index
    %c128_24 = arith.constant 128 : index
    %53 = vector.load %arg5[%c96_23, %c128_24] : memref<160x256xf32, #tpu.memory_space<vmem>>, vector<32x128xf32>
    tpu.vector_store %arg5[%c96_23, %c128_24], %52 {strides = array<i32>} : memref<160x256xf32, #tpu.memory_space<vmem>>, vector<32x128xf32>,
    %c126_i32_25 = arith.constant 126 : i32
    %54 = tpu.dynamic_rotate %35 by %c126_i32_25 dim 1 : vector<32x128xf32>, i32 -> vector<32x128xf32>
    %55 = vector.shape_cast %37 : vector<32x1xf32> to vector<32x1xf32>
    %56 = vector.broadcast %55 : vector<32x1xf32> to vector<32x128xf32>
    %57 = arith.select %8, %56, %54 : vector<32x128xi1>, vector<32x128xf32>
    %c128_26 = arith.constant 128 : index
    %c128_27 = arith.constant 128 : index
    %58 = vector.load %arg5[%c128_26, %c128_27] : memref<160x256xf32, #tpu.memory_space<vmem>>, vector<32x128xf32>
    tpu.vector_store %arg5[%c128_26, %c128_27], %57 {strides = array<i32>} : memref<160x256xf32, #tpu.memory_space<vmem>>, vector<32x128xf32>,
    %c0_28 = arith.constant 0 : index
    %c0_29 = arith.constant 0 : index
    %c0_30 = arith.constant 0 : index
    %59 = vector.load %arg2[%c0_28, %c0_29, %c0_30] : memref<2x32x160xf32, #tpu.memory_space<vmem>>, vector<1x32x160xf32>
    %60 = vector.shape_cast %59 : vector<1x32x160xf32> to vector<32x160xf32>
    %c0_31 = arith.constant 0 : index
    %c0_32 = arith.constant 0 : index
    %61 = vector.load %arg5[%c0_31, %c0_32] : memref<160x256xf32, #tpu.memory_space<vmem>>, vector<160x256xf32>
    %cst = arith.constant dense<0.000000e+00> : vector<32x256xf32>
    %62 = tpu.matmul %60, %61, %cst {dimension_numbers = #tpu.dot_dimension_numbers<[1], [0], [0], [1], [0, 0, 1, 1], [], []>} : vector<32x160xf32>, vector<160x256xf32>, vector<32x256xf32> -> vector<32x256xf32>
    %c0_33 = arith.constant 0 : index
    %c0_34 = arith.constant 0 : index
    %c0_35 = arith.constant 0 : index
    %63 = vector.load %arg3[%c0_33, %c0_34, %c0_35] : memref<2x32x1xf32, #tpu.memory_space<vmem>>, vector<1x32x1xf32>
    %64 = vector.shape_cast %63 : vector<1x32x1xf32> to vector<32x1xf32>
    %65 = vector.broadcast %64 : vector<32x1xf32> to vector<32x256xf32>
    %66 = arith.addf %62, %65 : vector<32x256xf32>
    %cst_36 = arith.constant 0.000000e+00 : f32
    %67 = vector.broadcast %cst_36 : f32 to vector<32x256xf32>
    %68 = arith.maximumf %66, %67 : vector<32x256xf32>
    %69 = vector.extract_strided_slice %68 {offsets = [0, 0], sizes = [32, 128], strides = [1, 1]} : vector<32x256xf32> to vector<32x128xf32>
    %70 = vector.extract_strided_slice %69 {offsets = [0, 0], sizes = [32, 1], strides = [1, 1]} : vector<32x128xf32> to vector<32x1xf32>
    %71 = vector.extract_strided_slice %69 {offsets = [0, 127], sizes = [32, 1], strides = [1, 1]} : vector<32x128xf32> to vector<32x1xf32>
    %c2_i32_37 = arith.constant 2 : i32
    %72 = tpu.dynamic_rotate %69 by %c2_i32_37 dim 1 : vector<32x128xf32>, i32 -> vector<32x128xf32>
    %73 = vector.shape_cast %70 : vector<32x1xf32> to vector<32x1xf32>
    %74 = vector.broadcast %73 : vector<32x1xf32> to vector<32x128xf32>
    %75 = arith.select %2, %74, %72 : vector<32x128xi1>, vector<32x128xf32>
    %c0_38 = arith.constant 0 : index
    %c0_39 = arith.constant 0 : index
    %76 = vector.load %arg5[%c0_38, %c0_39] : memref<160x256xf32, #tpu.memory_space<vmem>>, vector<32x128xf32>
    tpu.vector_store %arg5[%c0_38, %c0_39], %75 {strides = array<i32>} : memref<160x256xf32, #tpu.memory_space<vmem>>, vector<32x128xf32>,
    %c1_i32_40 = arith.constant 1 : i32
    %77 = tpu.dynamic_rotate %69 by %c1_i32_40 dim 1 : vector<32x128xf32>, i32 -> vector<32x128xf32>
    %78 = vector.shape_cast %70 : vector<32x1xf32> to vector<32x1xf32>
    %79 = vector.broadcast %78 : vector<32x1xf32> to vector<32x128xf32>
    %80 = arith.select %4, %79, %77 : vector<32x128xi1>, vector<32x128xf32>
    %c32_41 = arith.constant 32 : index
    %c0_42 = arith.constant 0 : index
    %81 = vector.load %arg5[%c32_41, %c0_42] : memref<160x256xf32, #tpu.memory_space<vmem>>, vector<32x128xf32>
    tpu.vector_store %arg5[%c32_41, %c0_42], %80 {strides = array<i32>} : memref<160x256xf32, #tpu.memory_space<vmem>>, vector<32x128xf32>,
    %c64_43 = arith.constant 64 : index
    %c0_44 = arith.constant 0 : index
    %82 = vector.load %arg5[%c64_43, %c0_44] : memref<160x256xf32, #tpu.memory_space<vmem>>, vector<32x128xf32>
    tpu.vector_store %arg5[%c64_43, %c0_44], %69 {strides = array<i32>} : memref<160x256xf32, #tpu.memory_space<vmem>>, vector<32x128xf32>,
    %c127_i32_45 = arith.constant 127 : i32
    %83 = tpu.dynamic_rotate %69 by %c127_i32_45 dim 1 : vector<32x128xf32>, i32 -> vector<32x128xf32>
    %84 = vector.shape_cast %71 : vector<32x1xf32> to vector<32x1xf32>
    %85 = vector.broadcast %84 : vector<32x1xf32> to vector<32x128xf32>
    %86 = arith.select %6, %85, %83 : vector<32x128xi1>, vector<32x128xf32>
    %c96_46 = arith.constant 96 : index
    %c0_47 = arith.constant 0 : index
    %87 = vector.load %arg5[%c96_46, %c0_47] : memref<160x256xf32, #tpu.memory_space<vmem>>, vector<32x128xf32>
    tpu.vector_store %arg5[%c96_46, %c0_47], %86 {strides = array<i32>} : memref<160x256xf32, #tpu.memory_space<vmem>>, vector<32x128xf32>,
    %c126_i32_48 = arith.constant 126 : i32
    %88 = tpu.dynamic_rotate %69 by %c126_i32_48 dim 1 : vector<32x128xf32>, i32 -> vector<32x128xf32>
    %89 = vector.shape_cast %71 : vector<32x1xf32> to vector<32x1xf32>
    %90 = vector.broadcast %89 : vector<32x1xf32> to vector<32x128xf32>
    %91 = arith.select %8, %90, %88 : vector<32x128xi1>, vector<32x128xf32>
    %c128_49 = arith.constant 128 : index
    %c0_50 = arith.constant 0 : index
    %92 = vector.load %arg5[%c128_49, %c0_50] : memref<160x256xf32, #tpu.memory_space<vmem>>, vector<32x128xf32>
    tpu.vector_store %arg5[%c128_49, %c0_50], %91 {strides = array<i32>} : memref<160x256xf32, #tpu.memory_space<vmem>>, vector<32x128xf32>,
    %93 = vector.extract_strided_slice %68 {offsets = [0, 128], sizes = [32, 128], strides = [1, 1]} : vector<32x256xf32> to vector<32x128xf32>
    %94 = vector.extract_strided_slice %93 {offsets = [0, 0], sizes = [32, 1], strides = [1, 1]} : vector<32x128xf32> to vector<32x1xf32>
    %95 = vector.extract_strided_slice %93 {offsets = [0, 127], sizes = [32, 1], strides = [1, 1]} : vector<32x128xf32> to vector<32x1xf32>
    %c2_i32_51 = arith.constant 2 : i32
    %96 = tpu.dynamic_rotate %93 by %c2_i32_51 dim 1 : vector<32x128xf32>, i32 -> vector<32x128xf32>
    %97 = vector.shape_cast %94 : vector<32x1xf32> to vector<32x1xf32>
    %98 = vector.broadcast %97 : vector<32x1xf32> to vector<32x128xf32>
    %99 = arith.select %2, %98, %96 : vector<32x128xi1>, vector<32x128xf32>
    %c0_52 = arith.constant 0 : index
    %c128_53 = arith.constant 128 : index
    %100 = vector.load %arg5[%c0_52, %c128_53] : memref<160x256xf32, #tpu.memory_space<vmem>>, vector<32x128xf32>
    tpu.vector_store %arg5[%c0_52, %c128_53], %99 {strides = array<i32>} : memref<160x256xf32, #tpu.memory_space<vmem>>, vector<32x128xf32>,
    %c1_i32_54 = arith.constant 1 : i32
    %101 = tpu.dynamic_rotate %93 by %c1_i32_54 dim 1 : vector<32x128xf32>, i32 -> vector<32x128xf32>
    %102 = vector.shape_cast %94 : vector<32x1xf32> to vector<32x1xf32>
    %103 = vector.broadcast %102 : vector<32x1xf32> to vector<32x128xf32>
    %104 = arith.select %4, %103, %101 : vector<32x128xi1>, vector<32x128xf32>
    %c32_55 = arith.constant 32 : index
    %c128_56 = arith.constant 128 : index
    %105 = vector.load %arg5[%c32_55, %c128_56] : memref<160x256xf32, #tpu.memory_space<vmem>>, vector<32x128xf32>
    tpu.vector_store %arg5[%c32_55, %c128_56], %104 {strides = array<i32>} : memref<160x256xf32, #tpu.memory_space<vmem>>, vector<32x128xf32>,
    %c64_57 = arith.constant 64 : index
    %c128_58 = arith.constant 128 : index
    %106 = vector.load %arg5[%c64_57, %c128_58] : memref<160x256xf32, #tpu.memory_space<vmem>>, vector<32x128xf32>
    tpu.vector_store %arg5[%c64_57, %c128_58], %93 {strides = array<i32>} : memref<160x256xf32, #tpu.memory_space<vmem>>, vector<32x128xf32>,
    %c127_i32_59 = arith.constant 127 : i32
    %107 = tpu.dynamic_rotate %93 by %c127_i32_59 dim 1 : vector<32x128xf32>, i32 -> vector<32x128xf32>
    %108 = vector.shape_cast %95 : vector<32x1xf32> to vector<32x1xf32>
    %109 = vector.broadcast %108 : vector<32x1xf32> to vector<32x128xf32>
    %110 = arith.select %6, %109, %107 : vector<32x128xi1>, vector<32x128xf32>
    %c96_60 = arith.constant 96 : index
    %c128_61 = arith.constant 128 : index
    %111 = vector.load %arg5[%c96_60, %c128_61] : memref<160x256xf32, #tpu.memory_space<vmem>>, vector<32x128xf32>
    tpu.vector_store %arg5[%c96_60, %c128_61], %110 {strides = array<i32>} : memref<160x256xf32, #tpu.memory_space<vmem>>, vector<32x128xf32>,
    %c126_i32_62 = arith.constant 126 : i32
    %112 = tpu.dynamic_rotate %93 by %c126_i32_62 dim 1 : vector<32x128xf32>, i32 -> vector<32x128xf32>
    %113 = vector.shape_cast %95 : vector<32x1xf32> to vector<32x1xf32>
    %114 = vector.broadcast %113 : vector<32x1xf32> to vector<32x128xf32>
    %115 = arith.select %8, %114, %112 : vector<32x128xi1>, vector<32x128xf32>
    %c128_63 = arith.constant 128 : index
    %c128_64 = arith.constant 128 : index
    %116 = vector.load %arg5[%c128_63, %c128_64] : memref<160x256xf32, #tpu.memory_space<vmem>>, vector<32x128xf32>
    tpu.vector_store %arg5[%c128_63, %c128_64], %115 {strides = array<i32>} : memref<160x256xf32, #tpu.memory_space<vmem>>, vector<32x128xf32>,
    %c1_65 = arith.constant 1 : index
    %c0_66 = arith.constant 0 : index
    %c0_67 = arith.constant 0 : index
    %117 = vector.load %arg2[%c1_65, %c0_66, %c0_67] : memref<2x32x160xf32, #tpu.memory_space<vmem>>, vector<1x32x160xf32>
    %118 = vector.shape_cast %117 : vector<1x32x160xf32> to vector<32x160xf32>
    %c0_68 = arith.constant 0 : index
    %c0_69 = arith.constant 0 : index
    %119 = vector.load %arg5[%c0_68, %c0_69] : memref<160x256xf32, #tpu.memory_space<vmem>>, vector<160x256xf32>
    %cst_70 = arith.constant dense<0.000000e+00> : vector<32x256xf32>
    %120 = tpu.matmul %118, %119, %cst_70 {dimension_numbers = #tpu.dot_dimension_numbers<[1], [0], [0], [1], [0, 0, 1, 1], [], []>} : vector<32x160xf32>, vector<160x256xf32>, vector<32x256xf32> -> vector<32x256xf32>
    %c1_71 = arith.constant 1 : index
    %c0_72 = arith.constant 0 : index
    %c0_73 = arith.constant 0 : index
    %121 = vector.load %arg3[%c1_71, %c0_72, %c0_73] : memref<2x32x1xf32, #tpu.memory_space<vmem>>, vector<1x32x1xf32>
    %122 = vector.shape_cast %121 : vector<1x32x1xf32> to vector<32x1xf32>
    %123 = vector.broadcast %122 : vector<32x1xf32> to vector<32x256xf32>
    %124 = arith.addf %120, %123 : vector<32x256xf32>
    %125 = vector.extract_strided_slice %124 {offsets = [0, 0], sizes = [32, 128], strides = [1, 1]} : vector<32x256xf32> to vector<32x128xf32>
    %c0_74 = arith.constant 0 : index
    %c0_75 = arith.constant 0 : index
    %c0_76 = arith.constant 0 : index
    %126 = vector.load %arg1[%c0_74, %c0_75, %c0_76] : memref<2x32x128xf32, #tpu.memory_space<vmem>>, vector<1x32x128xf32>
    %127 = vector.shape_cast %126 : vector<1x32x128xf32> to vector<32x128xf32>
    %128 = arith.addf %125, %127 : vector<32x128xf32>
    %cst_77 = arith.constant 0.000000e+00 : f32
    %129 = vector.broadcast %cst_77 : f32 to vector<32x128xf32>
    %130 = arith.maximumf %128, %129 : vector<32x128xf32>
    %c0_78 = arith.constant 0 : index
    %c0_79 = arith.constant 0 : index
    %c0_80 = arith.constant 0 : index
    %131 = vector.load %arg4[%c0_78, %c0_79, %c0_80] : memref<2x32x128xf32, #tpu.memory_space<vmem>>, vector<1x32x128xf32>
    %132 = vector.shape_cast %131 : vector<1x32x128xf32> to vector<32x128xf32>
    %133 = vector.shape_cast %130 : vector<32x128xf32> to vector<1x32x128xf32>
    tpu.vector_store %arg4[%c0_78, %c0_79, %c0_80], %133 {strides = array<i32>} : memref<2x32x128xf32, #tpu.memory_space<vmem>>, vector<1x32x128xf32>,
    %134 = vector.extract_strided_slice %124 {offsets = [0, 128], sizes = [32, 128], strides = [1, 1]} : vector<32x256xf32> to vector<32x128xf32>
    %c1_81 = arith.constant 1 : index
    %c0_82 = arith.constant 0 : index
    %c0_83 = arith.constant 0 : index
    %135 = vector.load %arg1[%c1_81, %c0_82, %c0_83] : memref<2x32x128xf32, #tpu.memory_space<vmem>>, vector<1x32x128xf32>
    %136 = vector.shape_cast %135 : vector<1x32x128xf32> to vector<32x128xf32>
    %137 = arith.addf %134, %136 : vector<32x128xf32>
    %cst_84 = arith.constant 0.000000e+00 : f32
    %138 = vector.broadcast %cst_84 : f32 to vector<32x128xf32>
    %139 = arith.maximumf %137, %138 : vector<32x128xf32>
    %c1_85 = arith.constant 1 : index
    %c0_86 = arith.constant 0 : index
    %c0_87 = arith.constant 0 : index
    %140 = vector.load %arg4[%c1_85, %c0_86, %c0_87] : memref<2x32x128xf32, #tpu.memory_space<vmem>>, vector<1x32x128xf32>
    %141 = vector.shape_cast %140 : vector<1x32x128xf32> to vector<32x128xf32>
    %142 = vector.shape_cast %139 : vector<32x128xf32> to vector<1x32x128xf32>
    tpu.vector_store %arg4[%c1_85, %c0_86, %c0_87], %142 {strides = array<i32>} : memref<2x32x128xf32, #tpu.memory_space<vmem>>, vector<1x32x128xf32>,
    return
  }
  func.func @transform_0(%arg0: i32) -> (i32, i32, i32) {
    %c0_i32 = arith.constant 0 : i32
    %c0_i32_0 = arith.constant 0 : i32
    %c0_i32_1 = arith.constant 0 : i32
    return %arg0, %c0_i32, %c0_i32_0 : i32, i32, i32
  }
  func.func @transform_1(%arg0: i32) -> (i32, i32, i32) {
    %c0_i32 = arith.constant 0 : i32
    %c0_i32_0 = arith.constant 0 : i32
    %c0_i32_1 = arith.constant 0 : i32
    %c0_i32_2 = arith.constant 0 : i32
    return %c0_i32, %c0_i32_0, %c0_i32_1 : i32, i32, i32
  }
  func.func @transform_2(%arg0: i32) -> (i32, i32, i32) {
    %c0_i32 = arith.constant 0 : i32
    %c0_i32_0 = arith.constant 0 : i32
    %c0_i32_1 = arith.constant 0 : i32
    %c0_i32_2 = arith.constant 0 : i32
    return %c0_i32, %c0_i32_0, %c0_i32_1 : i32, i32, i32
  }
  func.func @transform_3(%arg0: i32) -> (i32, i32, i32) {
    %c0_i32 = arith.constant 0 : i32
    %c0_i32_0 = arith.constant 0 : i32
    %c0_i32_1 = arith.constant 0 : i32
    return %arg0, %c0_i32, %c0_i32_0 : i32, i32, i32
  }
}

</mosaic_0001>

<llo_original>
// kernel: residual_block_forward.1
$region0: #{residual_block_forward.1}
  #allocation0 [shape = 'u32[]', space=smem, size = 0x4, offset = 0x4, fixed_abs, tag = 'smem constant byte address 0x4 - core index']
  #allocation1 [shape = 'u32[72,128]{1,0:T(1,128)}', space=vmem, size = 0x9000, scoped, tag = 'internal scratch']
  #allocation2 [shape = 'f32[160,256]{1,0:T(8,128)}', space=vmem, size = 0x28000, scoped, tag = 'scratch operand']
  %s0 = inlined_call_operand.vmem [shape: f32[2,32,128], index: 0, kind: input, shape index: {}]
  %s1 = inlined_call_operand.hbm [shape: f32[2,32,160], index: 1, kind: input, shape index: {}]
  %s2 = inlined_call_operand.vmem [shape: f32[2,32,1], index: 2, kind: input, shape index: {}]
  %s3 = inlined_call_operand.hbm [shape: f32[2,32,128], index: 3, kind: output, shape index: {}]
  %s4 = sld [smem:[#allocation0]]
  $region26: #{residual_block_forward.1} parent=0
    _
  %s6 = ssub.s32 1, %s4
  %s7 = scalar_select 0, %s6, %s4
  $region1: #{residual_block_forward.1} parent=0
    #allocation3 [shape = 'u8[65536]{0}', space=vmem, size = 0x10000, scoped, tag = 'input window, operand 1, single buffered']
    #allocation4 [shape = 's32[1]{0}', space=sflag, size = 0x4, scoped, tag = 'scoped memory for residual_block_forward.1']
    #allocation5 [shape = 's32[1]{0}', space=sflag, size = 0x4, scoped, tag = 'scoped memory for residual_block_forward.1']
    #allocation6 [shape = 'u8[32768]{0}', space=vmem, size = 0x8000, scoped, tag = 'output window, operand 0, single buffered']
    %8 = vsyncpa [#allocation4], 0
    %9 = vsyncpa [#allocation5], 0
    // Predicated region
    $region2: #{residual_block_forward.1} parent=1 // pred_check
      _
    $region3: #{residual_block_forward.1} parent=1 // pred_check_branch
      %11 = sbr.rel (0) target = $region5
    $region4: #{residual_block_forward.1} parent=1 // pred_region
      _
    $region5: #{residual_block_forward.1} parent=1 // pred_fallthru
      _
    // Predicated region
    $region6: #{residual_block_forward.1} parent=1 // pred_check
      _
    $region7: #{residual_block_forward.1} parent=1 // pred_check_branch
      %13 = sbr.rel (0) target = $region9
    $region8: #{residual_block_forward.1} parent=1 // pred_region
      %15 = vsyncadd [#allocation4], 0
      %s16 = sshll.u32 %s1, 4
      %s17 = int_to_ptr.hbm [resolvable:$true] %s16
      %s18 = sshll.u32 [#allocation3], 4
      %s19 = int_to_ptr.vmem [resolvable:$true] %s18
      %24 = dma.hbm_to_vmem [thread:$0]  %s17, 2048, %s19, [#allocation4], 256, 256, 16
    $region9: #{residual_block_forward.1} parent=1 // pred_fallthru
      _
    // Predicated region
    $region10: #{residual_block_forward.1} parent=1 // pred_check
      _
    $region11: #{residual_block_forward.1} parent=1 // pred_check_branch
      %26 = sbr.rel (0) target = $region13
    $region12: #{residual_block_forward.1} parent=1 // pred_region
      _
    $region13: #{residual_block_forward.1} parent=1 // pred_fallthru
      _
    // Predicated region
    $region14: #{residual_block_forward.1} parent=1 // pred_check
      _
    $region15: #{residual_block_forward.1} parent=1 // pred_check_branch
      %28 = sbr.rel (0) target = $region17
    $region16: #{residual_block_forward.1} parent=1 // pred_region
      %30 = dma.done [#allocation4], 2048
    $region17: #{residual_block_forward.1} parent=1 // pred_fallthru
      _
    %v31 = vlaneseq
    %v32 = vand.u32 %v31, 127
    %vm33 = vcmp.lt.s32.totalorder %v32, 2
    %vm34 = vcmp.lt.s32.totalorder %v32, 1
    %vm35 = vcmp.ge.s32.totalorder %v32, 127
    %vm36 = vcmp.ge.s32.totalorder %v32, 126
    %v37 = vld [vmem:[%s0] sm:$0xff]
    %v38 = vld [vmem:[%s0 + $0x8] sm:$0xff]
    %v39 = vld [vmem:[%s0 + $0x10] sm:$0xff]
    %v40 = vld [vmem:[%s0 + $0x18] sm:$0xff]
    %41 = vrot.lane.b32.xlu0 %v37, 2
    %v42 = vpop.permute.xlu0 %41
    %43 = vrot.lane.b32.xlu0 %v38, 2
    %v44 = vpop.permute.xlu0 %43
    %45 = vrot.lane.b32.xlu0 %v39, 2
    %v46 = vpop.permute.xlu0 %45
    %47 = vrot.lane.b32.xlu0 %v40, 2
    %v48 = vpop.permute.xlu0 %47
    %50 = vset.pattern.permute.xlu0 0
    %51 = vperm.xlu0 %50, %v37
    %v52 = vpop.permute.xlu0 %51
    %55 = vset.pattern.permute.xlu0 0
    %56 = vperm.xlu0 %55, %v38
    %v57 = vpop.permute.xlu0 %56
    %60 = vset.pattern.permute.xlu0 0
    %61 = vperm.xlu0 %60, %v39
    %v62 = vpop.permute.xlu0 %61
    %65 = vset.pattern.permute.xlu0 0
    %66 = vperm.xlu0 %65, %v40
    %v67 = vpop.permute.xlu0 %66
    %v69 = vsel %vm33, %v52, %v42
    %v70 = vsel %vm33, %v57, %v44
    %v71 = vsel %vm33, %v62, %v46
    %v72 = vsel %vm33, %v67, %v48
    %73 = vst [vmem:[#allocation2] sm:$0xff] %v69
    %74 = vst [vmem:[#allocation2 + $0x10] sm:$0xff] %v70
    %75 = vst [vmem:[#allocation2 + $0x20] sm:$0xff] %v71
    %76 = vst [vmem:[#allocation2 + $0x30] sm:$0xff] %v72
    %77 = vrot.lane.b32.xlu0 %v37, 1
    %v78 = vpop.permute.xlu0 %77
    %79 = vrot.lane.b32.xlu0 %v38, 1
    %v80 = vpop.permute.xlu0 %79
    %81 = vrot.lane.b32.xlu0 %v39, 1
    %v82 = vpop.permute.xlu0 %81
    %83 = vrot.lane.b32.xlu0 %v40, 1
    %v84 = vpop.permute.xlu0 %83
    %v85 = vsel %vm34, %v52, %v78
    %v86 = vsel %vm34, %v57, %v80
    %v87 = vsel %vm34, %v62, %v82
    %v88 = vsel %vm34, %v67, %v84
    %89 = vst [vmem:[#allocation2 + $0x40] sm:$0xff] %v85
    %90 = vst [vmem:[#allocation2 + $0x50] sm:$0xff] %v86
    %91 = vst [vmem:[#allocation2 + $0x60] sm:$0xff] %v87
    %92 = vst [vmem:[#allocation2 + $0x70] sm:$0xff] %v88
    %93 = vst [vmem:[#allocation2 + $0x80] sm:$0xff] %v37
    %94 = vst [vmem:[#allocation2 + $0x90] sm:$0xff] %v38
    %95 = vst [vmem:[#allocation2 + $0xa0] sm:$0xff] %v39
    %96 = vst [vmem:[#allocation2 + $0xb0] sm:$0xff] %v40
    %97 = vrot.lane.b32.xlu0 %v37, 127
    %v98 = vpop.permute.xlu0 %97
    %99 = vrot.lane.b32.xlu0 %v38, 127
    %v100 = vpop.permute.xlu0 %99
    %101 = vrot.lane.b32.xlu0 %v39, 127
    %v102 = vpop.permute.xlu0 %101
    %103 = vrot.lane.b32.xlu0 %v40, 127
    %v104 = vpop.permute.xlu0 %103
    %105 = vset.pattern.permute.xlu0 127
    %106 = vperm.xlu0 %105, %v37
    %v107 = vpop.permute.xlu0 %106
    %109 = vset.pattern.permute.xlu0 127
    %110 = vperm.xlu0 %109, %v38
    %v111 = vpop.permute.xlu0 %110
    %113 = vset.pattern.permute.xlu0 127
    %114 = vperm.xlu0 %113, %v39
    %v115 = vpop.permute.xlu0 %114
    %117 = vset.pattern.permute.xlu0 127
    %118 = vperm.xlu0 %117, %v40
    %v119 = vpop.permute.xlu0 %118
    %v121 = vsel %vm35, %v107, %v98
    %v122 = vsel %vm35, %v111, %v100
    %v123 = vsel %vm35, %v115, %v102
    %v124 = vsel %vm35, %v119, %v104
    %125 = vst [vmem:[#allocation2 + $0xc0] sm:$0xff] %v121
    %126 = vst [vmem:[#allocation2 + $0xd0] sm:$0xff] %v122
    %127 = vst [vmem:[#allocation2 + $0xe0] sm:$0xff] %v123
    %128 = vst [vmem:[#allocation2 + $0xf0] sm:$0xff] %v124
    %129 = vrot.lane.b32.xlu0 %v37, 126
    %v130 = vpop.permute.xlu0 %129
    %131 = vrot.lane.b32.xlu0 %v38, 126
    %v132 = vpop.permute.xlu0 %131
    %133 = vrot.lane.b32.xlu0 %v39, 126
    %v134 = vpop.permute.xlu0 %133
    %135 = vrot.lane.b32.xlu0 %v40, 126
    %v136 = vpop.permute.xlu0 %135
    %v137 = vsel %vm36, %v107, %v130
    %v138 = vsel %vm36, %v111, %v132
    %v139 = vsel %vm36, %v115, %v134
    %v140 = vsel %vm36, %v119, %v136
    %141 = vst [vmem:[#allocation2 + $0x100] sm:$0xff] %v137
    %142 = vst [vmem:[#allocation2 + $0x110] sm:$0xff] %v138
    %143 = vst [vmem:[#allocation2 + $0x120] sm:$0xff] %v139
    %144 = vst [vmem:[#allocation2 + $0x130] sm:$0xff] %v140
    %s145 = scalar_lea.vmem %s0, 32
    %v146 = vld [vmem:[%s145] sm:$0xff]
    %v147 = vld [vmem:[%s145 + $0x8] sm:$0xff]
    %v148 = vld [vmem:[%s145 + $0x10] sm:$0xff]
    %v149 = vld [vmem:[%s145 + $0x18] sm:$0xff]
    %150 = vrot.lane.b32.xlu0 %v146, 2
    %v151 = vpop.permute.xlu0 %150
    %152 = vrot.lane.b32.xlu0 %v147, 2
    %v153 = vpop.permute.xlu0 %152
    %154 = vrot.lane.b32.xlu0 %v148, 2
    %v155 = vpop.permute.xlu0 %154
    %156 = vrot.lane.b32.xlu0 %v149, 2
    %v157 = vpop.permute.xlu0 %156
    %159 = vset.pattern.permute.xlu0 0
    %160 = vperm.xlu0 %159, %v146
    %v161 = vpop.permute.xlu0 %160
    %164 = vset.pattern.permute.xlu0 0
    %165 = vperm.xlu0 %164, %v147
    %v166 = vpop.permute.xlu0 %165
    %169 = vset.pattern.permute.xlu0 0
    %170 = vperm.xlu0 %169, %v148
    %v171 = vpop.permute.xlu0 %170
    %174 = vset.pattern.permute.xlu0 0
    %175 = vperm.xlu0 %174, %v149
    %v176 = vpop.permute.xlu0 %175
    %v178 = vsel %vm33, %v161, %v151
    %v179 = vsel %vm33, %v166, %v153
    %v180 = vsel %vm33, %v171, %v155
    %v181 = vsel %vm33, %v176, %v157
    %182 = vst [vmem:[#allocation2 + $0x8] sm:$0xff] %v178
    %183 = vst [vmem:[#allocation2 + $0x18] sm:$0xff] %v179
    %184 = vst [vmem:[#allocation2 + $0x28] sm:$0xff] %v180
    %185 = vst [vmem:[#allocation2 + $0x38] sm:$0xff] %v181
    %186 = vrot.lane.b32.xlu0 %v146, 1
    %v187 = vpop.permute.xlu0 %186
    %188 = vrot.lane.b32.xlu0 %v147, 1
    %v189 = vpop.permute.xlu0 %188
    %190 = vrot.lane.b32.xlu0 %v148, 1
    %v191 = vpop.permute.xlu0 %190
    %192 = vrot.lane.b32.xlu0 %v149, 1
    %v193 = vpop.permute.xlu0 %192
    %v194 = vsel %vm34, %v161, %v187
    %v195 = vsel %vm34, %v166, %v189
    %v196 = vsel %vm34, %v171, %v191
    %v197 = vsel %vm34, %v176, %v193
    %198 = vst [vmem:[#allocation2 + $0x48] sm:$0xff] %v194
    %199 = vst [vmem:[#allocation2 + $0x58] sm:$0xff] %v195
    %200 = vst [vmem:[#allocation2 + $0x68] sm:$0xff] %v196
    %201 = vst [vmem:[#allocation2 + $0x78] sm:$0xff] %v197
    %202 = vst [vmem:[#allocation2 + $0x88] sm:$0xff] %v146
    %203 = vst [vmem:[#allocation2 + $0x98] sm:$0xff] %v147
    %204 = vst [vmem:[#allocation2 + $0xa8] sm:$0xff] %v148
    %205 = vst [vmem:[#allocation2 + $0xb8] sm:$0xff] %v149
    %206 = vrot.lane.b32.xlu0 %v146, 127
    %v207 = vpop.permute.xlu0 %206
    %208 = vrot.lane.b32.xlu0 %v147, 127
    %v209 = vpop.permute.xlu0 %208
    %210 = vrot.lane.b32.xlu0 %v148, 127
    %v211 = vpop.permute.xlu0 %210
    %212 = vrot.lane.b32.xlu0 %v149, 127
    %v213 = vpop.permute.xlu0 %212
    %214 = vset.pattern.permute.xlu0 127
    %215 = vperm.xlu0 %214, %v146
    %v216 = vpop.permute.xlu0 %215
    %218 = vset.pattern.permute.xlu0 127
    %219 = vperm.xlu0 %218, %v147
    %v220 = vpop.permute.xlu0 %219
    %222 = vset.pattern.permute.xlu0 127
    %223 = vperm.xlu0 %222, %v148
    %v224 = vpop.permute.xlu0 %223
    %226 = vset.pattern.permute.xlu0 127
    %227 = vperm.xlu0 %226, %v149
    %v228 = vpop.permute.xlu0 %227
    %v230 = vsel %vm35, %v216, %v207
    %v231 = vsel %vm35, %v220, %v209
    %v232 = vsel %vm35, %v224, %v211
    %v233 = vsel %vm35, %v228, %v213
    %234 = vst [vmem:[#allocation2 + $0xc8] sm:$0xff] %v230
    %235 = vst [vmem:[#allocation2 + $0xd8] sm:$0xff] %v231
    %236 = vst [vmem:[#allocation2 + $0xe8] sm:$0xff] %v232
    %237 = vst [vmem:[#allocation2 + $0xf8] sm:$0xff] %v233
    %238 = vrot.lane.b32.xlu0 %v146, 126
    %v239 = vpop.permute.xlu0 %238
    %240 = vrot.lane.b32.xlu0 %v147, 126
    %v241 = vpop.permute.xlu0 %240
    %242 = vrot.lane.b32.xlu0 %v148, 126
    %v243 = vpop.permute.xlu0 %242
    %244 = vrot.lane.b32.xlu0 %v149, 126
    %v245 = vpop.permute.xlu0 %244
    %v246 = vsel %vm36, %v216, %v239
    %v247 = vsel %vm36, %v220, %v241
    %v248 = vsel %vm36, %v224, %v243
    %v249 = vsel %vm36, %v228, %v245
    %250 = vst [vmem:[#allocation2 + $0x108] sm:$0xff] %v246
    %251 = vst [vmem:[#allocation2 + $0x118] sm:$0xff] %v247
    %252 = vst [vmem:[#allocation2 + $0x128] sm:$0xff] %v248
    %253 = vst [vmem:[#allocation2 + $0x138] sm:$0xff] %v249
    %v254 = vld [vmem:[#allocation3] sm:$0xff]
    %v255 = vld [vmem:[#allocation3 + $0x8] sm:$0xff]
    %v256 = vld [vmem:[#allocation3 + $0x10] sm:$0xff]
    %v257 = vld [vmem:[#allocation3 + $0x18] sm:$0xff]
    %v258 = vld [vmem:[#allocation3 + $0x20] sm:$0xff]
    %v259 = vld [vmem:[#allocation3 + $0x28] sm:$0xff]
    %v260 = vld [vmem:[#allocation3 + $0x30] sm:$0xff]
    %v261 = vld [vmem:[#allocation3 + $0x38] sm:$0xff]
    %v262 = vld [vmem:[#allocation2] sm:$0xff]
    %v263 = vld [vmem:[#allocation2 + $0x8] sm:$0xff]
    %v264 = vld [vmem:[#allocation2 + $0x10] sm:$0xff]
    %v265 = vld [vmem:[#allocation2 + $0x18] sm:$0xff]
    %v266 = vld [vmem:[#allocation2 + $0x20] sm:$0xff]
    %v267 = vld [vmem:[#allocation2 + $0x28] sm:$0xff]
    %v268 = vld [vmem:[#allocation2 + $0x30] sm:$0xff]
    %v269 = vld [vmem:[#allocation2 + $0x38] sm:$0xff]
    %v270 = vld [vmem:[#allocation2 + $0x40] sm:$0xff]
    %v271 = vld [vmem:[#allocation2 + $0x48] sm:$0xff]
    %v272 = vld [vmem:[#allocation2 + $0x50] sm:$0xff]
    %v273 = vld [vmem:[#allocation2 + $0x58] sm:$0xff]
    %v274 = vld [vmem:[#allocation2 + $0x60] sm:$0xff]
    %v275 = vld [vmem:[#allocation2 + $0x68] sm:$0xff]
    %v276 = vld [vmem:[#allocation2 + $0x70] sm:$0xff]
    %v277 = vld [vmem:[#allocation2 + $0x78] sm:$0xff]
    %v278 = vld [vmem:[#allocation2 + $0x80] sm:$0xff]
    %v279 = vld [vmem:[#allocation2 + $0x88] sm:$0xff]
    %v280 = vld [vmem:[#allocation2 + $0x90] sm:$0xff]
    %v281 = vld [vmem:[#allocation2 + $0x98] sm:$0xff]
    %v282 = vld [vmem:[#allocation2 + $0xa0] sm:$0xff]
    %v283 = vld [vmem:[#allocation2 + $0xa8] sm:$0xff]
    %v284 = vld [vmem:[#allocation2 + $0xb0] sm:$0xff]
    %v285 = vld [vmem:[#allocation2 + $0xb8] sm:$0xff]
    %v286 = vld [vmem:[#allocation2 + $0xc0] sm:$0xff]
    %v287 = vld [vmem:[#allocation2 + $0xc8] sm:$0xff]
    %v288 = vld [vmem:[#allocation2 + $0xd0] sm:$0xff]
    %v289 = vld [vmem:[#allocation2 + $0xd8] sm:$0xff]
    %v290 = vld [vmem:[#allocation2 + $0xe0] sm:$0xff]
    %v291 = vld [vmem:[#allocation2 + $0xe8] sm:$0xff]
    %v292 = vld [vmem:[#allocation2 + $0xf0] sm:$0xff]
    %v293 = vld [vmem:[#allocation2 + $0xf8] sm:$0xff]
    %v294 = vld [vmem:[#allocation2 + $0x100] sm:$0xff]
    %v295 = vld [vmem:[#allocation2 + $0x108] sm:$0xff]
    %v296 = vld [vmem:[#allocation2 + $0x110] sm:$0xff]
    %v297 = vld [vmem:[#allocation2 + $0x118] sm:$0xff]
    %v298 = vld [vmem:[#allocation2 + $0x120] sm:$0xff]
    %v299 = vld [vmem:[#allocation2 + $0x128] sm:$0xff]
    %v300 = vld [vmem:[#allocation2 + $0x130] sm:$0xff]
    %v301 = vld [vmem:[#allocation2 + $0x138] sm:$0xff]
    %v302 = vld [vmem:[%s2] sm:$0xff]
    %v303 = vld [vmem:[%s2 + $0x8] sm:$0xff]
    %v304 = vld [vmem:[%s2 + $0x10] sm:$0xff]
    %v305 = vld [vmem:[%s2 + $0x18] sm:$0xff]
    %307 = vset.pattern.permute.xlu0 0
    %308 = vperm.xlu0 %307, %v302
    %v309 = vpop.permute.xlu0 %308
    %312 = vset.pattern.permute.xlu0 0
    %313 = vperm.xlu0 %312, %v303
    %v314 = vpop.permute.xlu0 %313
    %317 = vset.pattern.permute.xlu0 0
    %318 = vperm.xlu0 %317, %v304
    %v319 = vpop.permute.xlu0 %318
    %322 = vset.pattern.permute.xlu0 0
    %323 = vperm.xlu0 %322, %v305
    %v324 = vpop.permute.xlu0 %323
    %vm326 = vcmask 261120
    %v328 = vsel %vm326, %v255, 0
    %v331 = vsel %vm326, %v257, 0
    %v334 = vsel %vm326, %v259, 0
    %v337 = vsel %vm326, %v261, 0
    %339 = vmatpush.msra.mxu0 %v292
    %340 = vmatpush.msra.mxu0 %v290
    %341 = vmatpush.msra.mxu0 %v288
    %342 = vmatpush.msra.mxu0 %v286
    %343 = vmatpush.msra.mxu0 %v284
    %344 = vmatpush.msra.mxu0 %v282
    %345 = vmatpush.msra.mxu0 %v280
    %346 = vmatpush.msra.mxu0 %v278
    %347 = vmatpush.msra.mxu0 %v276
    %348 = vmatpush.msra.mxu0 %v274
    %349 = vmatpush.msra.mxu0 %v272
    %350 = vmatpush.msra.mxu0 %v270
    %351 = vmatpush.msra.mxu0 %v268
    %352 = vmatpush.msra.mxu0 %v266
    %353 = vmatpush.msra.mxu0 %v264
    %354 = vmatpush.msra.mxu0 %v262
    %355 = vmatmul.f32.gmra.mxu0 %v254
    %v356 = vpop.f32.mrf.mxu0
    %v357 = vadd.f32 %v309, %v356
    %358 = vmatmul.f32.gmra.mxu0 %v256
    %v359 = vpop.f32.mrf.mxu0
    %v360 = vadd.f32 %v314, %v359
    %361 = vmatmul.f32.gmra.mxu0 %v258
    %v362 = vpop.f32.mrf.mxu0
    %v363 = vadd.f32 %v319, %v362
    %364 = vmatmul.f32.gmra.mxu0 %v260
    %v365 = vpop.f32.mrf.mxu0
    %v366 = vadd.f32 %v324, %v365
    %367 = vdwg.mxu0
    %368 = vmatpush.msra.mxu0 0.0
    %369 = vmatpush.msra.mxu0 0.0
    %370 = vmatpush.msra.mxu0 0.0
    %371 = vmatpush.msra.mxu0 0.0
    %372 = vmatpush.msra.mxu0 0.0
    %373 = vmatpush.msra.mxu0 0.0
    %374 = vmatpush.msra.mxu0 0.0
    %375 = vmatpush.msra.mxu0 0.0
    %376 = vmatpush.msra.mxu0 0.0
    %377 = vmatpush.msra.mxu0 0.0
    %378 = vmatpush.msra.mxu0 0.0
    %379 = vmatpush.msra.mxu0 0.0
    %380 = vmatpush.msra.mxu0 %v300
    %381 = vmatpush.msra.mxu0 %v298
    %382 = vmatpush.msra.mxu0 %v296
    %383 = vmatpush.msra.mxu0 %v294
    %384 = vmatmul.f32.gmra.mxu0 %v328
    %v385 = vpop.f32.mrf.mxu0
    %v386 = vadd.f32 %v357, %v385
    %387 = vmatmul.f32.gmra.mxu0 %v331
    %v388 = vpop.f32.mrf.mxu0
    %v389 = vadd.f32 %v360, %v388
    %390 = vmatmul.f32.gmra.mxu0 %v334
    %v391 = vpop.f32.mrf.mxu0
    %v392 = vadd.f32 %v363, %v391
    %393 = vmatmul.f32.gmra.mxu0 %v337
    %v394 = vpop.f32.mrf.mxu0
    %v395 = vadd.f32 %v366, %v394
    %396 = vdwg.mxu0
    %397 = vmatpush.msra.mxu0 %v293
    %398 = vmatpush.msra.mxu0 %v291
    %399 = vmatpush.msra.mxu0 %v289
    %400 = vmatpush.msra.mxu0 %v287
    %401 = vmatpush.msra.mxu0 %v285
    %402 = vmatpush.msra.mxu0 %v283
    %403 = vmatpush.msra.mxu0 %v281
    %404 = vmatpush.msra.mxu0 %v279
    %405 = vmatpush.msra.mxu0 %v277
    %406 = vmatpush.msra.mxu0 %v275
    %407 = vmatpush.msra.mxu0 %v273
    %408 = vmatpush.msra.mxu0 %v271
    %409 = vmatpush.msra.mxu0 %v269
    %410 = vmatpush.msra.mxu0 %v267
    %411 = vmatpush.msra.mxu0 %v265
    %412 = vmatpush.msra.mxu0 %v263
    %413 = vmatmul.f32.gmra.mxu0 %v254
    %v414 = vpop.f32.mrf.mxu0
    %v415 = vadd.f32 %v309, %v414
    %416 = vmatmul.f32.gmra.mxu0 %v256
    %v417 = vpop.f32.mrf.mxu0
    %v418 = vadd.f32 %v314, %v417
    %419 = vmatmul.f32.gmra.mxu0 %v258
    %v420 = vpop.f32.mrf.mxu0
    %v421 = vadd.f32 %v319, %v420
    %422 = vmatmul.f32.gmra.mxu0 %v260
    %v423 = vpop.f32.mrf.mxu0
    %v424 = vadd.f32 %v324, %v423
    %425 = vdwg.mxu0
    %426 = vmatpush.msra.mxu0 0.0
    %427 = vmatpush.msra.mxu0 0.0
    %428 = vmatpush.msra.mxu0 0.0
    %429 = vmatpush.msra.mxu0 0.0
    %430 = vmatpush.msra.mxu0 0.0
    %431 = vmatpush.msra.mxu0 0.0
    %432 = vmatpush.msra.mxu0 0.0
    %433 = vmatpush.msra.mxu0 0.0
    %434 = vmatpush.msra.mxu0 0.0
    %435 = vmatpush.msra.mxu0 0.0
    %436 = vmatpush.msra.mxu0 0.0
    %437 = vmatpush.msra.mxu0 0.0
    %438 = vmatpush.msra.mxu0 %v301
    %439 = vmatpush.msra.mxu0 %v299
    %440 = vmatpush.msra.mxu0 %v297
    %441 = vmatpush.msra.mxu0 %v295
    %442 = vmatmul.f32.gmra.mxu0 %v328
    %v443 = vpop.f32.mrf.mxu0
    %v444 = vadd.f32 %v415, %v443
    %445 = vmatmul.f32.gmra.mxu0 %v331
    %v446 = vpop.f32.mrf.mxu0
    %v447 = vadd.f32 %v418, %v446
    %448 = vmatmul.f32.gmra.mxu0 %v334
    %v449 = vpop.f32.mrf.mxu0
    %v450 = vadd.f32 %v421, %v449
    %451 = vmatmul.f32.gmra.mxu0 %v337
    %v452 = vpop.f32.mrf.mxu0
    %v453 = vadd.f32 %v424, %v452
    %454 = vdwg.mxu0
    %v455 = vmax.f32 %v386, 0.0
    %v456 = vmax.f32 %v444, 0.0
    %v457 = vmax.f32 %v389, 0.0
    %v458 = vmax.f32 %v447, 0.0
    %v459 = vmax.f32 %v392, 0.0
    %v460 = vmax.f32 %v450, 0.0
    %v461 = vmax.f32 %v395, 0.0
    %v462 = vmax.f32 %v453, 0.0
    %463 = vrot.lane.b32.xlu0 %v455, 2
    %v464 = vpop.permute.xlu0 %463
    %465 = vrot.lane.b32.xlu0 %v457, 2
    %v466 = vpop.permute.xlu0 %465
    %467 = vrot.lane.b32.xlu0 %v459, 2
    %v468 = vpop.permute.xlu0 %467
    %469 = vrot.lane.b32.xlu0 %v461, 2
    %v470 = vpop.permute.xlu0 %469
    %472 = vset.pattern.permute.xlu0 0
    %473 = vperm.xlu0 %472, %v455
    %v474 = vpop.permute.xlu0 %473
    %477 = vset.pattern.permute.xlu0 0
    %478 = vperm.xlu0 %477, %v457
    %v479 = vpop.permute.xlu0 %478
    %482 = vset.pattern.permute.xlu0 0
    %483 = vperm.xlu0 %482, %v459
    %v484 = vpop.permute.xlu0 %483
    %487 = vset.pattern.permute.xlu0 0
    %488 = vperm.xlu0 %487, %v461
    %v489 = vpop.permute.xlu0 %488
    %v491 = vsel %vm33, %v474, %v464
    %v492 = vsel %vm33, %v479, %v466
    %v493 = vsel %vm33, %v484, %v468
    %v494 = vsel %vm33, %v489, %v470
    %495 = vst [vmem:[#allocation2] sm:$0xff] %v491
    %496 = vst [vmem:[#allocation2 + $0x10] sm:$0xff] %v492
    %497 = vst [vmem:[#allocation2 + $0x20] sm:$0xff] %v493
    %498 = vst [vmem:[#allocation2 + $0x30] sm:$0xff] %v494
    %499 = vrot.lane.b32.xlu0 %v455, 1
    %v500 = vpop.permute.xlu0 %499
    %501 = vrot.lane.b32.xlu0 %v457, 1
    %v502 = vpop.permute.xlu0 %501
    %503 = vrot.lane.b32.xlu0 %v459, 1
    %v504 = vpop.permute.xlu0 %503
    %505 = vrot.lane.b32.xlu0 %v461, 1
    %v506 = vpop.permute.xlu0 %505
    %v507 = vsel %vm34, %v474, %v500
    %v508 = vsel %vm34, %v479, %v502
    %v509 = vsel %vm34, %v484, %v504
    %v510 = vsel %vm34, %v489, %v506
    %511 = vst [vmem:[#allocation2 + $0x40] sm:$0xff] %v507
    %512 = vst [vmem:[#allocation2 + $0x50] sm:$0xff] %v508
    %513 = vst [vmem:[#allocation2 + $0x60] sm:$0xff] %v509
    %514 = vst [vmem:[#allocation2 + $0x70] sm:$0xff] %v510
    %515 = vst [vmem:[#allocation2 + $0x80] sm:$0xff] %v455
    %516 = vst [vmem:[#allocation2 + $0x90] sm:$0xff] %v457
    %517 = vst [vmem:[#allocation2 + $0xa0] sm:$0xff] %v459
    %518 = vst [vmem:[#allocation2 + $0xb0] sm:$0xff] %v461
    %519 = vrot.lane.b32.xlu0 %v455, 127
    %v520 = vpop.permute.xlu0 %519
    %521 = vrot.lane.b32.xlu0 %v457, 127
    %v522 = vpop.permute.xlu0 %521
    %523 = vrot.lane.b32.xlu0 %v459, 127
    %v524 = vpop.permute.xlu0 %523
    %525 = vrot.lane.b32.xlu0 %v461, 127
    %v526 = vpop.permute.xlu0 %525
    %527 = vset.pattern.permute.xlu0 127
    %528 = vperm.xlu0 %527, %v455
    %v529 = vpop.permute.xlu0 %528
    %531 = vset.pattern.permute.xlu0 127
    %532 = vperm.xlu0 %531, %v457
    %v533 = vpop.permute.xlu0 %532
    %535 = vset.pattern.permute.xlu0 127
    %536 = vperm.xlu0 %535, %v459
    %v537 = vpop.permute.xlu0 %536
    %539 = vset.pattern.permute.xlu0 127
    %540 = vperm.xlu0 %539, %v461
    %v541 = vpop.permute.xlu0 %540
    %v543 = vsel %vm35, %v529, %v520
    %v544 = vsel %vm35, %v533, %v522
    %v545 = vsel %vm35, %v537, %v524
    %v546 = vsel %vm35, %v541, %v526
    %547 = vst [vmem:[#allocation2 + $0xc0] sm:$0xff] %v543
    %548 = vst [vmem:[#allocation2 + $0xd0] sm:$0xff] %v544
    %549 = vst [vmem:[#allocation2 + $0xe0] sm:$0xff] %v545
    %550 = vst [vmem:[#allocation2 + $0xf0] sm:$0xff] %v546
    %551 = vrot.lane.b32.xlu0 %v455, 126
    %v552 = vpop.permute.xlu0 %551
    %553 = vrot.lane.b32.xlu0 %v457, 126
    %v554 = vpop.permute.xlu0 %553
    %555 = vrot.lane.b32.xlu0 %v459, 126
    %v556 = vpop.permute.xlu0 %555
    %557 = vrot.lane.b32.xlu0 %v461, 126
    %v558 = vpop.permute.xlu0 %557
    %v559 = vsel %vm36, %v529, %v552
    %v560 = vsel %vm36, %v533, %v554
    %v561 = vsel %vm36, %v537, %v556
    %v562 = vsel %vm36, %v541, %v558
    %563 = vst [vmem:[#allocation2 + $0x100] sm:$0xff] %v559
    %564 = vst [vmem:[#allocation2 + $0x110] sm:$0xff] %v560
    %565 = vst [vmem:[#allocation2 + $0x120] sm:$0xff] %v561
    %566 = vst [vmem:[#allocation2 + $0x130] sm:$0xff] %v562
    %567 = vrot.lane.b32.xlu0 %v456, 2
    %v568 = vpop.permute.xlu0 %567
    %569 = vrot.lane.b32.xlu0 %v458, 2
    %v570 = vpop.permute.xlu0 %569
    %571 = vrot.lane.b32.xlu0 %v460, 2
    %v572 = vpop.permute.xlu0 %571
    %573 = vrot.lane.b32.xlu0 %v462, 2
    %v574 = vpop.permute.xlu0 %573
    %576 = vset.pattern.permute.xlu0 0
    %577 = vperm.xlu0 %576, %v456
    %v578 = vpop.permute.xlu0 %577
    %581 = vset.pattern.permute.xlu0 0
    %582 = vperm.xlu0 %581, %v458
    %v583 = vpop.permute.xlu0 %582
    %586 = vset.pattern.permute.xlu0 0
    %587 = vperm.xlu0 %586, %v460
    %v588 = vpop.permute.xlu0 %587
    %591 = vset.pattern.permute.xlu0 0
    %592 = vperm.xlu0 %591, %v462
    %v593 = vpop.permute.xlu0 %592
    %v595 = vsel %vm33, %v578, %v568
    %v596 = vsel %vm33, %v583, %v570
    %v597 = vsel %vm33, %v588, %v572
    %v598 = vsel %vm33, %v593, %v574
    %599 = vst [vmem:[#allocation2 + $0x8] sm:$0xff] %v595
    %600 = vst [vmem:[#allocation2 + $0x18] sm:$0xff] %v596
    %601 = vst [vmem:[#allocation2 + $0x28] sm:$0xff] %v597
    %602 = vst [vmem:[#allocation2 + $0x38] sm:$0xff] %v598
    %603 = vrot.lane.b32.xlu0 %v456, 1
    %v604 = vpop.permute.xlu0 %603
    %605 = vrot.lane.b32.xlu0 %v458, 1
    %v606 = vpop.permute.xlu0 %605
    %607 = vrot.lane.b32.xlu0 %v460, 1
    %v608 = vpop.permute.xlu0 %607
    %609 = vrot.lane.b32.xlu0 %v462, 1
    %v610 = vpop.permute.xlu0 %609
    %v611 = vsel %vm34, %v578, %v604
    %v612 = vsel %vm34, %v583, %v606
    %v613 = vsel %vm34, %v588, %v608
    %v614 = vsel %vm34, %v593, %v610
    %615 = vst [vmem:[#allocation2 + $0x48] sm:$0xff] %v611
    %616 = vst [vmem:[#allocation2 + $0x58] sm:$0xff] %v612
    %617 = vst [vmem:[#allocation2 + $0x68] sm:$0xff] %v613
    %618 = vst [vmem:[#allocation2 + $0x78] sm:$0xff] %v614
    %619 = vst [vmem:[#allocation2 + $0x88] sm:$0xff] %v456
    %620 = vst [vmem:[#allocation2 + $0x98] sm:$0xff] %v458
    %621 = vst [vmem:[#allocation2 + $0xa8] sm:$0xff] %v460
    %622 = vst [vmem:[#allocation2 + $0xb8] sm:$0xff] %v462
    %623 = vrot.lane.b32.xlu0 %v456, 127
    %v624 = vpop.permute.xlu0 %623
    %625 = vrot.lane.b32.xlu0 %v458, 127
    %v626 = vpop.permute.xlu0 %625
    %627 = vrot.lane.b32.xlu0 %v460, 127
    %v628 = vpop.permute.xlu0 %627
    %629 = vrot.lane.b32.xlu0 %v462, 127
    %v630 = vpop.permute.xlu0 %629
    %631 = vset.pattern.permute.xlu0 127
    %632 = vperm.xlu0 %631, %v456
    %v633 = vpop.permute.xlu0 %632
    %635 = vset.pattern.permute.xlu0 127
    %636 = vperm.xlu0 %635, %v458
    %v637 = vpop.permute.xlu0 %636
    %639 = vset.pattern.permute.xlu0 127
    %640 = vperm.xlu0 %639, %v460
    %v641 = vpop.permute.xlu0 %640
    %643 = vset.pattern.permute.xlu0 127
    %644 = vperm.xlu0 %643, %v462
    %v645 = vpop.permute.xlu0 %644
    %v647 = vsel %vm35, %v633, %v624
    %v648 = vsel %vm35, %v637, %v626
    %v649 = vsel %vm35, %v641, %v628
    %v650 = vsel %vm35, %v645, %v630
    %651 = vst [vmem:[#allocation2 + $0xc8] sm:$0xff] %v647
    %652 = vst [vmem:[#allocation2 + $0xd8] sm:$0xff] %v648
    %653 = vst [vmem:[#allocation2 + $0xe8] sm:$0xff] %v649
    %654 = vst [vmem:[#allocation2 + $0xf8] sm:$0xff] %v650
    %655 = vrot.lane.b32.xlu0 %v456, 126
    %v656 = vpop.permute.xlu0 %655
    %657 = vrot.lane.b32.xlu0 %v458, 126
    %v658 = vpop.permute.xlu0 %657
    %659 = vrot.lane.b32.xlu0 %v460, 126
    %v660 = vpop.permute.xlu0 %659
    %661 = vrot.lane.b32.xlu0 %v462, 126
    %v662 = vpop.permute.xlu0 %661
    %v663 = vsel %vm36, %v633, %v656
    %v664 = vsel %vm36, %v637, %v658
    %v665 = vsel %vm36, %v641, %v660
    %v666 = vsel %vm36, %v645, %v662
    %667 = vst [vmem:[#allocation2 + $0x108] sm:$0xff] %v663
    %668 = vst [vmem:[#allocation2 + $0x118] sm:$0xff] %v664
    %669 = vst [vmem:[#allocation2 + $0x128] sm:$0xff] %v665
    %670 = vst [vmem:[#allocation2 + $0x138] sm:$0xff] %v666
    %s671 = scalar_lea.vmem [#allocation3], 64
    %v672 = vld [vmem:[%s671] sm:$0xff]
    %v673 = vld [vmem:[%s671 + $0x8] sm:$0xff]
    %v674 = vld [vmem:[%s671 + $0x10] sm:$0xff]
    %v675 = vld [vmem:[%s671 + $0x18] sm:$0xff]
    %v676 = vld [vmem:[%s671 + $0x20] sm:$0xff]
    %v677 = vld [vmem:[%s671 + $0x28] sm:$0xff]
    %v678 = vld [vmem:[%s671 + $0x30] sm:$0xff]
    %v679 = vld [vmem:[%s671 + $0x38] sm:$0xff]
    %v680 = vld [vmem:[#allocation2] sm:$0xff]
    %v681 = vld [vmem:[#allocation2 + $0x8] sm:$0xff]
    %v682 = vld [vmem:[#allocation2 + $0x10] sm:$0xff]
    %v683 = vld [vmem:[#allocation2 + $0x18] sm:$0xff]
    %v684 = vld [vmem:[#allocation2 + $0x20] sm:$0xff]
    %v685 = vld [vmem:[#allocation2 + $0x28] sm:$0xff]
    %v686 = vld [vmem:[#allocation2 + $0x30] sm:$0xff]
    %v687 = vld [vmem:[#allocation2 + $0x38] sm:$0xff]
    %v688 = vld [vmem:[#allocation2 + $0x40] sm:$0xff]
    %v689 = vld [vmem:[#allocation2 + $0x48] sm:$0xff]
    %v690 = vld [vmem:[#allocation2 + $0x50] sm:$0xff]
    %v691 = vld [vmem:[#allocation2 + $0x58] sm:$0xff]
    %v692 = vld [vmem:[#allocation2 + $0x60] sm:$0xff]
    %v693 = vld [vmem:[#allocation2 + $0x68] sm:$0xff]
    %v694 = vld [vmem:[#allocation2 + $0x70] sm:$0xff]
    %v695 = vld [vmem:[#allocation2 + $0x78] sm:$0xff]
    %v696 = vld [vmem:[#allocation2 + $0x80] sm:$0xff]
    %v697 = vld [vmem:[#allocation2 + $0x88] sm:$0xff]
    %v698 = vld [vmem:[#allocation2 + $0x90] sm:$0xff]
    %v699 = vld [vmem:[#allocation2 + $0x98] sm:$0xff]
    %v700 = vld [vmem:[#allocation2 + $0xa0] sm:$0xff]
    %v701 = vld [vmem:[#allocation2 + $0xa8] sm:$0xff]
    %v702 = vld [vmem:[#allocation2 + $0xb0] sm:$0xff]
    %v703 = vld [vmem:[#allocation2 + $0xb8] sm:$0xff]
    %v704 = vld [vmem:[#allocation2 + $0xc0] sm:$0xff]
    %v705 = vld [vmem:[#allocation2 + $0xc8] sm:$0xff]
    %v706 = vld [vmem:[#allocation2 + $0xd0] sm:$0xff]
    %v707 = vld [vmem:[#allocation2 + $0xd8] sm:$0xff]
    %v708 = vld [vmem:[#allocation2 + $0xe0] sm:$0xff]
    %v709 = vld [vmem:[#allocation2 + $0xe8] sm:$0xff]
    %v710 = vld [vmem:[#allocation2 + $0xf0] sm:$0xff]
    %v711 = vld [vmem:[#allocation2 + $0xf8] sm:$0xff]
    %v712 = vld [vmem:[#allocation2 + $0x100] sm:$0xff]
    %v713 = vld [vmem:[#allocation2 + $0x108] sm:$0xff]
    %v714 = vld [vmem:[#allocation2 + $0x110] sm:$0xff]
    %v715 = vld [vmem:[#allocation2 + $0x118] sm:$0xff]
    %v716 = vld [vmem:[#allocation2 + $0x120] sm:$0xff]
    %v717 = vld [vmem:[#allocation2 + $0x128] sm:$0xff]
    %v718 = vld [vmem:[#allocation2 + $0x130] sm:$0xff]
    %v719 = vld [vmem:[#allocation2 + $0x138] sm:$0xff]
    %s720 = scalar_lea.vmem %s2, 32
    %v721 = vld [vmem:[%s720] sm:$0xff]
    %v722 = vld [vmem:[%s720 + $0x8] sm:$0xff]
    %v723 = vld [vmem:[%s720 + $0x10] sm:$0xff]
    %v724 = vld [vmem:[%s720 + $0x18] sm:$0xff]
    %726 = vset.pattern.permute.xlu0 0
    %727 = vperm.xlu0 %726, %v721
    %v728 = vpop.permute.xlu0 %727
    %731 = vset.pattern.permute.xlu0 0
    %732 = vperm.xlu0 %731, %v722
    %v733 = vpop.permute.xlu0 %732
    %736 = vset.pattern.permute.xlu0 0
    %737 = vperm.xlu0 %736, %v723
    %v738 = vpop.permute.xlu0 %737
    %741 = vset.pattern.permute.xlu0 0
    %742 = vperm.xlu0 %741, %v724
    %v743 = vpop.permute.xlu0 %742
    %v746 = vsel %vm326, %v673, 0
    %v749 = vsel %vm326, %v675, 0
    %v752 = vsel %vm326, %v677, 0
    %v755 = vsel %vm326, %v679, 0
    %757 = vmatpush.msra.mxu0 %v710
    %758 = vmatpush.msra.mxu0 %v708
    %759 = vmatpush.msra.mxu0 %v706
    %760 = vmatpush.msra.mxu0 %v704
    %761 = vmatpush.msra.mxu0 %v702
    %762 = vmatpush.msra.mxu0 %v700
    %763 = vmatpush.msra.mxu0 %v698
    %764 = vmatpush.msra.mxu0 %v696
    %765 = vmatpush.msra.mxu0 %v694
    %766 = vmatpush.msra.mxu0 %v692
    %767 = vmatpush.msra.mxu0 %v690
    %768 = vmatpush.msra.mxu0 %v688
    %769 = vmatpush.msra.mxu0 %v686
    %770 = vmatpush.msra.mxu0 %v684
    %771 = vmatpush.msra.mxu0 %v682
    %772 = vmatpush.msra.mxu0 %v680
    %773 = vmatmul.f32.gmra.mxu0 %v672
    %v774 = vpop.f32.mrf.mxu0
    %v775 = vadd.f32 %v728, %v774
    %776 = vmatmul.f32.gmra.mxu0 %v674
    %v777 = vpop.f32.mrf.mxu0
    %v778 = vadd.f32 %v733, %v777
    %779 = vmatmul.f32.gmra.mxu0 %v676
    %v780 = vpop.f32.mrf.mxu0
    %v781 = vadd.f32 %v738, %v780
    %782 = vmatmul.f32.gmra.mxu0 %v678
    %v783 = vpop.f32.mrf.mxu0
    %v784 = vadd.f32 %v743, %v783
    %785 = vdwg.mxu0
    %786 = vmatpush.msra.mxu0 0.0
    %787 = vmatpush.msra.mxu0 0.0
    %788 = vmatpush.msra.mxu0 0.0
    %789 = vmatpush.msra.mxu0 0.0
    %790 = vmatpush.msra.mxu0 0.0
    %791 = vmatpush.msra.mxu0 0.0
    %792 = vmatpush.msra.mxu0 0.0
    %793 = vmatpush.msra.mxu0 0.0
    %794 = vmatpush.msra.mxu0 0.0
    %795 = vmatpush.msra.mxu0 0.0
    %796 = vmatpush.msra.mxu0 0.0
    %797 = vmatpush.msra.mxu0 0.0
    %798 = vmatpush.msra.mxu0 %v718
    %799 = vmatpush.msra.mxu0 %v716
    %800 = vmatpush.msra.mxu0 %v714
    %801 = vmatpush.msra.mxu0 %v712
    %802 = vmatmul.f32.gmra.mxu0 %v746
    %v803 = vpop.f32.mrf.mxu0
    %v804 = vadd.f32 %v775, %v803
    %805 = vmatmul.f32.gmra.mxu0 %v749
    %v806 = vpop.f32.mrf.mxu0
    %v807 = vadd.f32 %v778, %v806
    %808 = vmatmul.f32.gmra.mxu0 %v752
    %v809 = vpop.f32.mrf.mxu0
    %v810 = vadd.f32 %v781, %v809
    %811 = vmatmul.f32.gmra.mxu0 %v755
    %v812 = vpop.f32.mrf.mxu0
    %v813 = vadd.f32 %v784, %v812
    %814 = vdwg.mxu0
    %815 = vmatpush.msra.mxu0 %v711
    %816 = vmatpush.msra.mxu0 %v709
    %817 = vmatpush.msra.mxu0 %v707
    %818 = vmatpush.msra.mxu0 %v705
    %819 = vmatpush.msra.mxu0 %v703
    %820 = vmatpush.msra.mxu0 %v701
    %821 = vmatpush.msra.mxu0 %v699
    %822 = vmatpush.msra.mxu0 %v697
    %823 = vmatpush.msra.mxu0 %v695
    %824 = vmatpush.msra.mxu0 %v693
    %825 = vmatpush.msra.mxu0 %v691
    %826 = vmatpush.msra.mxu0 %v689
    %827 = vmatpush.msra.mxu0 %v687
    %828 = vmatpush.msra.mxu0 %v685
    %829 = vmatpush.msra.mxu0 %v683
    %830 = vmatpush.msra.mxu0 %v681
    %831 = vmatmul.f32.gmra.mxu0 %v672
    %v832 = vpop.f32.mrf.mxu0
    %v833 = vadd.f32 %v728, %v832
    %834 = vmatmul.f32.gmra.mxu0 %v674
    %v835 = vpop.f32.mrf.mxu0
    %v836 = vadd.f32 %v733, %v835
    %837 = vmatmul.f32.gmra.mxu0 %v676
    %v838 = vpop.f32.mrf.mxu0
    %v839 = vadd.f32 %v738, %v838
    %840 = vmatmul.f32.gmra.mxu0 %v678
    %v841 = vpop.f32.mrf.mxu0
    %v842 = vadd.f32 %v743, %v841
    %843 = vdwg.mxu0
    %844 = vmatpush.msra.mxu0 0.0
    %845 = vmatpush.msra.mxu0 0.0
    %846 = vmatpush.msra.mxu0 0.0
    %847 = vmatpush.msra.mxu0 0.0
    %848 = vmatpush.msra.mxu0 0.0
    %849 = vmatpush.msra.mxu0 0.0
    %850 = vmatpush.msra.mxu0 0.0
    %851 = vmatpush.msra.mxu0 0.0
    %852 = vmatpush.msra.mxu0 0.0
    %853 = vmatpush.msra.mxu0 0.0
    %854 = vmatpush.msra.mxu0 0.0
    %855 = vmatpush.msra.mxu0 0.0
    %856 = vmatpush.msra.mxu0 %v719
    %857 = vmatpush.msra.mxu0 %v717
    %858 = vmatpush.msra.mxu0 %v715
    %859 = vmatpush.msra.mxu0 %v713
    %860 = vmatmul.f32.gmra.mxu0 %v746
    %v861 = vpop.f32.mrf.mxu0
    %v862 = vadd.f32 %v833, %v861
    %863 = vmatmul.f32.gmra.mxu0 %v749
    %v864 = vpop.f32.mrf.mxu0
    %v865 = vadd.f32 %v836, %v864
    %866 = vmatmul.f32.gmra.mxu0 %v752
    %v867 = vpop.f32.mrf.mxu0
    %v868 = vadd.f32 %v839, %v867
    %869 = vmatmul.f32.gmra.mxu0 %v755
    %v870 = vpop.f32.mrf.mxu0
    %v871 = vadd.f32 %v842, %v870
    %872 = vdwg.mxu0
    %v873 = vld [vmem:[%s0] sm:$0xff]
    %v874 = vld [vmem:[%s0 + $0x8] sm:$0xff]
    %v875 = vld [vmem:[%s0 + $0x10] sm:$0xff]
    %v876 = vld [vmem:[%s0 + $0x18] sm:$0xff]
    %v877 = vadd.f32 %v804, %v873
    %v878 = vadd.f32 %v807, %v874
    %v879 = vadd.f32 %v810, %v875
    %v880 = vadd.f32 %v813, %v876
    %v881 = vmax.f32 %v877, 0.0
    %v882 = vmax.f32 %v878, 0.0
    %v883 = vmax.f32 %v879, 0.0
    %v884 = vmax.f32 %v880, 0.0
    %885 = vst [vmem:[#allocation6] sm:$0xff] %v881
    %886 = vst [vmem:[#allocation6 + $0x8] sm:$0xff] %v882
    %887 = vst [vmem:[#allocation6 + $0x10] sm:$0xff] %v883
    %888 = vst [vmem:[#allocation6 + $0x18] sm:$0xff] %v884
    %v889 = vld [vmem:[%s145] sm:$0xff]
    %v890 = vld [vmem:[%s145 + $0x8] sm:$0xff]
    %v891 = vld [vmem:[%s145 + $0x10] sm:$0xff]
    %v892 = vld [vmem:[%s145 + $0x18] sm:$0xff]
    %v893 = vadd.f32 %v862, %v889
    %v894 = vadd.f32 %v865, %v890
    %v895 = vadd.f32 %v868, %v891
    %v896 = vadd.f32 %v871, %v892
    %v897 = vmax.f32 %v893, 0.0
    %v898 = vmax.f32 %v894, 0.0
    %v899 = vmax.f32 %v895, 0.0
    %v900 = vmax.f32 %v896, 0.0
    %s901 = scalar_lea.vmem [#allocation6], 32
    %902 = vst [vmem:[%s901] sm:$0xff] %v897
    %903 = vst [vmem:[%s901 + $0x8] sm:$0xff] %v898
    %904 = vst [vmem:[%s901 + $0x10] sm:$0xff] %v899
    %905 = vst [vmem:[%s901 + $0x18] sm:$0xff] %v900
    // Predicated region
    $region18: #{residual_block_forward.1} parent=1 // pred_check
      _
    $region19: #{residual_block_forward.1} parent=1 // pred_check_branch
      %907 = sbr.rel (0) target = $region21
    $region20: #{residual_block_forward.1} parent=1 // pred_region
      %909 = vsyncadd [#allocation5], 0
      %s910 = sshll.u32 [#allocation6], 4
      %s911 = int_to_ptr.vmem [resolvable:$true] %s910
      %s912 = sshll.u32 %s3, 4
      %s913 = int_to_ptr.hbm [resolvable:$true] %s912
      %918 = dma.vmem_to_hbm [thread:$0]  %s911, 1024, %s913, [#allocation5], 128, 128, 8
    $region21: #{residual_block_forward.1} parent=1 // pred_fallthru
      _
    // Predicated region
    $region22: #{residual_block_forward.1} parent=1 // pred_check
      _
    $region23: #{residual_block_forward.1} parent=1 // pred_check_branch
      %920 = sbr.rel (0) target = $region25
    $region24: #{residual_block_forward.1} parent=1 // pred_region
      %922 = dma.done [#allocation5], 1024
    $region25: #{residual_block_forward.1} parent=1 // pred_fallthru
      _
    %923 = vsyncpa [#allocation4], 1
    %924 = vsyncpa [#allocation5], 1

</llo_original>
